<compile_context>
chip_gen: v5e
topology: v5e:2x2
jax: 0.10.0
libtpu: 0.0.40
codegen_flags: <defaults>
</compile_context>

<pallas_src>
import jax
import jax.numpy as jnp
from jax.experimental import pallas as pl
from jax.experimental.pallas import tpu as pltpu


def _round_up(x, m):
    return (x + m - 1) // m * m


def _vmem_limit_bytes():
    # v5e/v6e: 128 MiB physical -> raise the conservative scoped default to 64 MiB.
    # v7x:     64 MiB physical  -> cap at 48 MiB to leave headroom.
    try:
        cap = int(pltpu.get_tpu_info().vmem_capacity_bytes)
    except Exception:
        cap = 64 << 20
    return max(min(cap - (16 << 20), 64 << 20), 32 << 20)


def _choose_tile_m(m, per_row_bytes, budget_bytes=24 << 20, max_tm=8192):
    tm = budget_bytes // max(per_row_bytes, 1)
    tm = max(8, min(int(tm), max_tm))
    tm = (tm // 8) * 8
    return max(8, min(tm, _round_up(m, 8)))


# ----------------------------- shared body -----------------------------------
def _relu_conv(x1_ref, x2_ref, w1_ref, w2_ref):
    """ReLU + two 1x1 stride-2 convs (as matmuls), concatenated in-register.

    Keeps the MXU on the native input-dtype path (bf16 fast path when inputs
    are bf16) with f32 accumulation; no explicit LHS upcast.
    """
    x1 = jnp.maximum(x1_ref[...], 0)
    x2 = jnp.maximum(x2_ref[...], 0)
    a1 = jnp.dot(x1, w1_ref[...], preferred_element_type=jnp.float32)
    a2 = jnp.dot(x2, w2_ref[...], preferred_element_type=jnp.float32)
    return jnp.concatenate([a1, a2], axis=-1)          # (tm, C_out) f32


# ------------------------------- pass 1 ---------------------------------------
def _stats_kernel(x1_ref, x2_ref, w1_ref, w2_ref, sum_ref, ssq_ref):
    """Per-tile BN partial statistics only (no conv writeback to HBM).

    sum_ref/ssq_ref: (8, C_out) per-tile sub-lane partial sums; the final
    cross-sublane / cross-tile reduction happens once in plain JAX.  Each tile
    owns its own output block, so the grid axis is fully parallel (v7x
    megacore) and no serial accumulator is needed.
    """
    a = _relu_conv(x1_ref, x2_ref, w1_ref, w2_ref)     # (tm, C_out) f32
    p = a.reshape(a.shape[0] // 8, 8, a.shape[1])      # split sub-lane groups
    sum_ref[...] = jnp.sum(p, axis=0)                  # VPU adds across vregs
    ssq_ref[...] = jnp.sum(p * p, axis=0)


# ------------------------------- pass 2 ---------------------------------------
def _bn_kernel(x1_ref, x2_ref, w1_ref, w2_ref, scale_ref, shift_ref, o_ref):
    """Recompute ReLU + conv (cheap) and apply folded BN: out = a*scale + shift."""
    a = _relu_conv(x1_ref, x2_ref, w1_ref, w2_ref)
    o_ref[...] = (a * scale_ref[...] + shift_ref[...]).astype(o_ref.dtype)


def factorized_reduce(x_nchw, w1, w2, gamma, beta, *, eps=1e-3):
    """x_nchw: (N, C_in, H, W); w1/w2: (C_half, C_in, 1, 1); gamma/beta: (C_out,)."""
    N, C_in, H, W = x_nchw.shape
    C_half = w1.shape[0]
    C_out = 2 * C_half
    Ho, Wo = (H + 1) // 2, (W + 1) // 2
    M = N * Ho * Wo
    dtsz = jnp.dtype(x_nchw.dtype).itemsize

    # ---- glue: stride-2 subsamples for the two branches (data movement only;
    # no channel-concat copy — each branch streams into the kernel directly).
    x_nhwc = jnp.transpose(x_nchw, (0, 2, 3, 1))                   # (N, H, W, C_in)
    x1 = x_nhwc[:, ::2, ::2, :]                                    # x[2i, 2j]
    x2 = x_nhwc[:, 1::2, 1::2, :]                                  # x[2i+1, 2j+1]
    # odd H/W: shifted branch reads past the edge -> zero row/col there only
    # (zero rows are ReLU/conv no-ops, so BN statistics stay exact).
    x2 = jnp.pad(x2, ((0, 0), (0, Ho - x2.shape[1]), (0, Wo - x2.shape[2]), (0, 0)))
    x1 = x1.reshape(M, C_in)
    x2 = x2.reshape(M, C_in)

    # 1x1 conv weights as (C_in, C_half) matmul RHS in the input dtype.
    w1m = jnp.transpose(w1.reshape(C_half, C_in)).astype(x_nchw.dtype)
    w2m = jnp.transpose(w2.reshape(C_half, C_in)).astype(x_nchw.dtype)

    # Tile rows; account for all live bytes per row: double-buffered x1 + x2
    # input tiles, double-buffered output tile (pass 2), f32 conv temporaries.
    per_row = 4 * C_in * dtsz + 2 * C_out * dtsz + (2 * C_in + 2 * C_out) * 4
    tm = _choose_tile_m(M, per_row)
    Mp = _round_up(M, tm)
    if Mp != M:
        pad = ((0, Mp - M), (0, 0))
        x1 = jnp.pad(x1, pad)
        x2 = jnp.pad(x2, pad)
    G = Mp // tm
    grid = (G,)
    vmem_limit = _vmem_limit_bytes()

    x_specs = [pl.BlockSpec((tm, C_in), lambda i: (i, 0)),
               pl.BlockSpec((tm, C_in), lambda i: (i, 0))]
    w_specs = [pl.BlockSpec((C_in, C_half), lambda i: (0, 0)),
               pl.BlockSpec((C_in, C_half), lambda i: (0, 0))]
    # NOTE: the grid-invariant blocks (weights / scale / shift) could use
    # pipeline_mode=pl.Buffered(1) to skip their second buffer; they are tiny,
    # so default double-buffering is kept for maximum portability.

    # -------- pass 1: ReLU + conv + per-tile partial sum / sumsq only --------
    sum_part, ssq_part = pl.pallas_call(
        _stats_kernel,
        out_shape=[jax.ShapeDtypeStruct((G * 8, C_out), jnp.float32),
                   jax.ShapeDtypeStruct((G * 8, C_out), jnp.float32)],
        grid_spec=pltpu.PrefetchScalarGridSpec(
            num_scalar_prefetch=0, grid=grid,
            in_specs=x_specs + w_specs,
            out_specs=[pl.BlockSpec((8, C_out), lambda i: (i, 0)),
                       pl.BlockSpec((8, C_out), lambda i: (i, 0))]),
        compiler_params=pltpu.CompilerParams(
            dimension_semantics=("parallel",),          # per-tile stats -> both TCs
            vmem_limit_bytes=vmem_limit),
        cost_estimate=pl.CostEstimate(
            flops=2 * Mp * C_in * C_out + 3 * Mp * C_out,
            transcendentals=0,
            bytes_accessed=2 * Mp * C_in * dtsz + 2 * G * 8 * C_out * 4),
    )(x1, x2, w1m, w2m)

    # ---- tiny BN finalize (plain JAX, O(C_out)).  Per-tile partials reduced
    # here (instead of a serial in-kernel accumulator) — shorter dependency
    # chain and better accuracy.  E[x^2]-E[x]^2 is kept in f32; fine at these
    # magnitudes (ReLU output), clamped at 0 for safety.
    csum = jnp.sum(sum_part, axis=0)
    cssq = jnp.sum(ssq_part, axis=0)
    mean = csum / M
    var = jnp.maximum(cssq / M - mean * mean, 0.0)
    inv = jax.lax.rsqrt(var + jnp.float32(eps))
    g = gamma.astype(jnp.float32)
    b = beta.astype(jnp.float32)
    scale = (g * inv).reshape(1, C_out)
    shift = (b - mean * g * inv).reshape(1, C_out)

    # -------- pass 2: recompute ReLU + conv, apply folded BN, single store ----
    out_flat = pl.pallas_call(
        _bn_kernel,
        out_shape=jax.ShapeDtypeStruct((Mp, C_out), x_nchw.dtype),
        grid_spec=pltpu.PrefetchScalarGridSpec(
            num_scalar_prefetch=0, grid=grid,
            in_specs=x_specs + w_specs + [
                pl.BlockSpec((1, C_out), lambda i: (0, 0)),
                pl.BlockSpec((1, C_out), lambda i: (0, 0))],
            out_specs=pl.BlockSpec((tm, C_out), lambda i: (i, 0))),
        compiler_params=pltpu.CompilerParams(
            dimension_semantics=("parallel",),          # independent tiles
            vmem_limit_bytes=vmem_limit),
        cost_estimate=pl.CostEstimate(
            flops=2 * Mp * C_in * C_out + 2 * Mp * C_out,
            transcendentals=0,
            bytes_accessed=2 * Mp * C_in * dtsz + Mp * C_out * dtsz),
    )(x1, x2, w1m, w2m, scale, shift)

    out = out_flat[:M].reshape(N, Ho, Wo, C_out)
    return jnp.transpose(out, (0, 3, 1, 2))             # back to NCHW


def _reference(x_nchw, w1, w2, gamma, beta, eps=1e-3):
    """Pure-JAX reference mirroring the PyTorch forward (training-mode BN)."""
    N, C_in, H, W = x_nchw.shape
    C_half = w1.shape[0]
    x = jnp.maximum(x_nchw, 0.0)
    y = jnp.pad(x, ((0, 0), (0, 0), (0, 1), (0, 1)))[:, :, 1:, 1:]

    def conv1x1_s2(inp, w):
        s = inp[:, :, ::2, ::2]
        return jnp.einsum('nchw,oc->nohw', s, w.reshape(C_half, C_in))

    out = jnp.concatenate([conv1x1_s2(x, w1), conv1x1_s2(y, w2)], axis=1)
    mean = jnp.mean(out, axis=(0, 2, 3), keepdims=True)
    var = jnp.mean((out - mean) ** 2, axis=(0, 2, 3), keepdims=True)
    out = (out - mean) * jax.lax.rsqrt(var + eps)
    return out * gamma.reshape(1, -1, 1, 1) + beta.reshape(1, -1, 1, 1)


if __name__ == "__main__":
    N, C_in, H, W = 2, 4, 16, 16
    C_out = 8
    C_half = C_out // 2

    key = jax.random.PRNGKey(0)
    kx, k1, k2 = jax.random.split(key, 3)
    x = jax.random.normal(kx, (N, C_in, H, W), dtype=jnp.float32)
    # Deterministic synthetic parameters (shapes match nn.Conv2d / nn.BatchNorm2d)
    w1 = jax.random.normal(k1, (C_half, C_in, 1, 1), dtype=jnp.float32) * 0.1
    w2 = jax.random.normal(k2, (C_half, C_in, 1, 1), dtype=jnp.float32) * 0.1
    gamma = jnp.ones((C_out,), dtype=jnp.float32)    # PyTorch BN default affine init
    beta = jnp.zeros((C_out,), dtype=jnp.float32)

    fn = jax.jit(factorized_reduce)
    out = jax.block_until_ready(fn(x, w1, w2, gamma, beta))

    ref = _reference(x, w1, w2, gamma, beta)
    assert out.shape == (N, C_out, (H + 1) // 2, (W + 1) // 2), out.shape
    assert jnp.allclose(out, ref, atol=1e-4, rtol=1e-4), float(jnp.max(jnp.abs(out - ref)))
    print("KERNEL_OK")
</pallas_src>

<mosaic_0001>
module attributes {stable_mosaic.version = 11 : i64} {
  func.func @_stats_kernel(%arg0: i32, %arg1: memref<128x4xf32, #tpu.memory_space<vmem>>, %arg2: memref<128x4xf32, #tpu.memory_space<vmem>>, %arg3: memref<4x4xf32, #tpu.memory_space<vmem>>, %arg4: memref<4x4xf32, #tpu.memory_space<vmem>>, %arg5: memref<8x8xf32, #tpu.memory_space<vmem>>, %arg6: memref<8x8xf32, #tpu.memory_space<vmem>>) attributes {dimension_semantics = [#tpu.dimension_semantics<parallel>], iteration_bounds = array<i64: 1>, scalar_prefetch = 0 : i64, scratch_operands = 0 : i64, tpu.core_type = #tpu.core_type<tc>, window_params = [{transform_indices = @transform_0, window_bounds = array<i64: 128, 4>}, {transform_indices = @transform_1, window_bounds = array<i64: 128, 4>}, {pipeline_mode = #tpu.pipeline_mode<synchronous>, transform_indices = @transform_2, window_bounds = array<i64: 4, 4>}, {pipeline_mode = #tpu.pipeline_mode<synchronous>, transform_indices = @transform_3, window_bounds = array<i64: 4, 4>}, {transform_indices = @transform_4, window_bounds = array<i64: 8, 8>}, {transform_indices = @transform_5, window_bounds = array<i64: 8, 8>}]} {
    %c0 = arith.constant 0 : index
    %c0_0 = arith.constant 0 : index
    %0 = vector.load %arg1[%c0, %c0_0] : memref<128x4xf32, #tpu.memory_space<vmem>>, vector<128x4xf32>
    %cst = arith.constant 0.000000e+00 : f32
    %1 = vector.broadcast %cst : f32 to vector<128x4xf32>
    %2 = arith.maximumf %0, %1 : vector<128x4xf32>
    %c0_1 = arith.constant 0 : index
    %c0_2 = arith.constant 0 : index
    %3 = vector.load %arg2[%c0_1, %c0_2] : memref<128x4xf32, #tpu.memory_space<vmem>>, vector<128x4xf32>
    %cst_3 = arith.constant 0.000000e+00 : f32
    %4 = vector.broadcast %cst_3 : f32 to vector<128x4xf32>
    %5 = arith.maximumf %3, %4 : vector<128x4xf32>
    %c0_4 = arith.constant 0 : index
    %c0_5 = arith.constant 0 : index
    %6 = vector.load %arg3[%c0_4, %c0_5] : memref<4x4xf32, #tpu.memory_space<vmem>>, vector<4x4xf32>
    %cst_6 = arith.constant dense<0.000000e+00> : vector<128x4xf32>
    %7 = tpu.matmul %2, %6, %cst_6 {dimension_numbers = #tpu.dot_dimension_numbers<[1], [0], [0], [1], [0, 0, 1, 1], [], []>} : vector<128x4xf32>, vector<4x4xf32>, vector<128x4xf32> -> vector<128x4xf32>
    %c0_7 = arith.constant 0 : index
    %c0_8 = arith.constant 0 : index
    %8 = vector.load %arg4[%c0_7, %c0_8] : memref<4x4xf32, #tpu.memory_space<vmem>>, vector<4x4xf32>
    %cst_9 = arith.constant dense<0.000000e+00> : vector<128x4xf32>
    %9 = tpu.matmul %5, %8, %cst_9 {dimension_numbers = #tpu.dot_dimension_numbers<[1], [0], [0], [1], [0, 0, 1, 1], [], []>} : vector<128x4xf32>, vector<4x4xf32>, vector<128x4xf32> -> vector<128x4xf32>
    %10 = tpu.concatenate %7, %9 in 1 : vector<128x4xf32>, vector<128x4xf32> -> vector<128x8xf32>
    %11 = vector.shape_cast %10 : vector<128x8xf32> to vector<16x8x8xf32>
    %cst_10 = arith.constant dense<0.000000e+00> : vector<8x8xf32>
    %12 = vector.multi_reduction <add>, %11, %cst_10 [0] : vector<16x8x8xf32> to vector<8x8xf32>
    %c0_11 = arith.constant 0 : index
    %c0_12 = arith.constant 0 : index
    %13 = vector.load %arg5[%c0_11, %c0_12] : memref<8x8xf32, #tpu.memory_space<vmem>>, vector<8x8xf32>
    tpu.vector_store %arg5[%c0_11, %c0_12], %12 {strides = array<i32>} : memref<8x8xf32, #tpu.memory_space<vmem>>, vector<8x8xf32>,
    %14 = arith.mulf %11, %11 : vector<16x8x8xf32>
    %cst_13 = arith.constant dense<0.000000e+00> : vector<8x8xf32>
    %15 = vector.multi_reduction <add>, %14, %cst_13 [0] : vector<16x8x8xf32> to vector<8x8xf32>
    %c0_14 = arith.constant 0 : index
    %c0_15 = arith.constant 0 : index
    %16 = vector.load %arg6[%c0_14, %c0_15] : memref<8x8xf32, #tpu.memory_space<vmem>>, vector<8x8xf32>
    tpu.vector_store %arg6[%c0_14, %c0_15], %15 {strides = array<i32>} : memref<8x8xf32, #tpu.memory_space<vmem>>, vector<8x8xf32>,
    return
  }
  func.func @transform_0(%arg0: i32) -> (i32, i32) {
    %c0_i32 = arith.constant 0 : i32
    %c0_i32_0 = arith.constant 0 : i32
    return %arg0, %c0_i32 : i32, i32
  }
  func.func @transform_1(%arg0: i32) -> (i32, i32) {
    %c0_i32 = arith.constant 0 : i32
    %c0_i32_0 = arith.constant 0 : i32
    return %arg0, %c0_i32 : i32, i32
  }
  func.func @transform_2(%arg0: i32) -> (i32, i32) {
    %c0_i32 = arith.constant 0 : i32
    %c0_i32_0 = arith.constant 0 : i32
    %c0_i32_1 = arith.constant 0 : i32
    return %c0_i32, %c0_i32_0 : i32, i32
  }
  func.func @transform_3(%arg0: i32) -> (i32, i32) {
    %c0_i32 = arith.constant 0 : i32
    %c0_i32_0 = arith.constant 0 : i32
    %c0_i32_1 = arith.constant 0 : i32
    return %c0_i32, %c0_i32_0 : i32, i32
  }
  func.func @transform_4(%arg0: i32) -> (i32, i32) {
    %c0_i32 = arith.constant 0 : i32
    %c0_i32_0 = arith.constant 0 : i32
    return %arg0, %c0_i32 : i32, i32
  }
  func.func @transform_5(%arg0: i32) -> (i32, i32) {
    %c0_i32 = arith.constant 0 : i32
    %c0_i32_0 = arith.constant 0 : i32
    return %arg0, %c0_i32 : i32, i32
  }
}

module attributes {stable_mosaic.version = 11 : i64} {
  func.func @_bn_kernel(%arg0: i32, %arg1: memref<128x4xf32, #tpu.memory_space<vmem>>, %arg2: memref<128x4xf32, #tpu.memory_space<vmem>>, %arg3: memref<4x4xf32, #tpu.memory_space<vmem>>, %arg4: memref<4x4xf32, #tpu.memory_space<vmem>>, %arg5: memref<1x8xf32, #tpu.memory_space<vmem>>, %arg6: memref<1x8xf32, #tpu.memory_space<vmem>>, %arg7: memref<128x8xf32, #tpu.memory_space<vmem>>) attributes {dimension_semantics = [#tpu.dimension_semantics<parallel>], iteration_bounds = array<i64: 1>, scalar_prefetch = 0 : i64, scratch_operands = 0 : i64, tpu.core_type = #tpu.core_type<tc>, window_params = [{transform_indices = @transform_0, window_bounds = array<i64: 128, 4>}, {transform_indices = @transform_1, window_bounds = array<i64: 128, 4>}, {pipeline_mode = #tpu.pipeline_mode<synchronous>, transform_indices = @transform_2, window_bounds = array<i64: 4, 4>}, {pipeline_mode = #tpu.pipeline_mode<synchronous>, transform_indices = @transform_3, window_bounds = array<i64: 4, 4>}, {pipeline_mode = #tpu.pipeline_mode<synchronous>, transform_indices = @transform_4, window_bounds = array<i64: 1, 8>}, {pipeline_mode = #tpu.pipeline_mode<synchronous>, transform_indices = @transform_5, window_bounds = array<i64: 1, 8>}, {transform_indices = @transform_6, window_bounds = array<i64: 128, 8>}]} {
    %c0 = arith.constant 0 : index
    %c0_0 = arith.constant 0 : index
    %0 = vector.load %arg1[%c0, %c0_0] : memref<128x4xf32, #tpu.memory_space<vmem>>, vector<128x4xf32>
    %cst = arith.constant 0.000000e+00 : f32
    %1 = vector.broadcast %cst : f32 to vector<128x4xf32>
    %2 = arith.maximumf %0, %1 : vector<128x4xf32>
    %c0_1 = arith.constant 0 : index
    %c0_2 = arith.constant 0 : index
    %3 = vector.load %arg2[%c0_1, %c0_2] : memref<128x4xf32, #tpu.memory_space<vmem>>, vector<128x4xf32>
    %cst_3 = arith.constant 0.000000e+00 : f32
    %4 = vector.broadcast %cst_3 : f32 to vector<128x4xf32>
    %5 = arith.maximumf %3, %4 : vector<128x4xf32>
    %c0_4 = arith.constant 0 : index
    %c0_5 = arith.constant 0 : index
    %6 = vector.load %arg3[%c0_4, %c0_5] : memref<4x4xf32, #tpu.memory_space<vmem>>, vector<4x4xf32>
    %cst_6 = arith.constant dense<0.000000e+00> : vector<128x4xf32>
    %7 = tpu.matmul %2, %6, %cst_6 {dimension_numbers = #tpu.dot_dimension_numbers<[1], [0], [0], [1], [0, 0, 1, 1], [], []>} : vector<128x4xf32>, vector<4x4xf32>, vector<128x4xf32> -> vector<128x4xf32>
    %c0_7 = arith.constant 0 : index
    %c0_8 = arith.constant 0 : index
    %8 = vector.load %arg4[%c0_7, %c0_8] : memref<4x4xf32, #tpu.memory_space<vmem>>, vector<4x4xf32>
    %cst_9 = arith.constant dense<0.000000e+00> : vector<128x4xf32>
    %9 = tpu.matmul %5, %8, %cst_9 {dimension_numbers = #tpu.dot_dimension_numbers<[1], [0], [0], [1], [0, 0, 1, 1], [], []>} : vector<128x4xf32>, vector<4x4xf32>, vector<128x4xf32> -> vector<128x4xf32>
    %10 = tpu.concatenate %7, %9 in 1 : vector<128x4xf32>, vector<128x4xf32> -> vector<128x8xf32>
    %c0_10 = arith.constant 0 : index
    %c0_11 = arith.constant 0 : index
    %11 = vector.load %arg5[%c0_10, %c0_11] : memref<1x8xf32, #tpu.memory_space<vmem>>, vector<1x8xf32>
    %12 = vector.broadcast %11 : vector<1x8xf32> to vector<128x8xf32>
    %13 = arith.mulf %10, %12 : vector<128x8xf32>
    %c0_12 = arith.constant 0 : index
    %c0_13 = arith.constant 0 : index
    %14 = vector.load %arg6[%c0_12, %c0_13] : memref<1x8xf32, #tpu.memory_space<vmem>>, vector<1x8xf32>
    %15 = vector.broadcast %14 : vector<1x8xf32> to vector<128x8xf32>
    %16 = arith.addf %13, %15 : vector<128x8xf32>
    %c0_14 = arith.constant 0 : index
    %c0_15 = arith.constant 0 : index
    %17 = vector.load %arg7[%c0_14, %c0_15] : memref<128x8xf32, #tpu.memory_space<vmem>>, vector<128x8xf32>
    tpu.vector_store %arg7[%c0_14, %c0_15], %16 {strides = array<i32>} : memref<128x8xf32, #tpu.memory_space<vmem>>, vector<128x8xf32>,
    return
  }
  func.func @transform_0(%arg0: i32) -> (i32, i32) {
    %c0_i32 = arith.constant 0 : i32
    %c0_i32_0 = arith.constant 0 : i32
    return %arg0, %c0_i32 : i32, i32
  }
  func.func @transform_1(%arg0: i32) -> (i32, i32) {
    %c0_i32 = arith.constant 0 : i32
    %c0_i32_0 = arith.constant 0 : i32
    return %arg0, %c0_i32 : i32, i32
  }
  func.func @transform_2(%arg0: i32) -> (i32, i32) {
    %c0_i32 = arith.constant 0 : i32
    %c0_i32_0 = arith.constant 0 : i32
    %c0_i32_1 = arith.constant 0 : i32
    return %c0_i32, %c0_i32_0 : i32, i32
  }
  func.func @transform_3(%arg0: i32) -> (i32, i32) {
    %c0_i32 = arith.constant 0 : i32
    %c0_i32_0 = arith.constant 0 : i32
    %c0_i32_1 = arith.constant 0 : i32
    return %c0_i32, %c0_i32_0 : i32, i32
  }
  func.func @transform_4(%arg0: i32) -> (i32, i32) {
    %c0_i32 = arith.constant 0 : i32
    %c0_i32_0 = arith.constant 0 : i32
    %c0_i32_1 = arith.constant 0 : i32
    return %c0_i32, %c0_i32_0 : i32, i32
  }
  func.func @transform_5(%arg0: i32) -> (i32, i32) {
    %c0_i32 = arith.constant 0 : i32
    %c0_i32_0 = arith.constant 0 : i32
    %c0_i32_1 = arith.constant 0 : i32
    return %c0_i32, %c0_i32_0 : i32, i32
  }
  func.func @transform_6(%arg0: i32) -> (i32, i32) {
    %c0_i32 = arith.constant 0 : i32
    %c0_i32_0 = arith.constant 0 : i32
    return %arg0, %c0_i32 : i32, i32
  }
}

</mosaic_0001>

<llo_original>
// kernel: factorized_reduce.2
$region0: #{factorized_reduce.2}
  #allocation0 [shape = 'u32[]', space=smem, size = 0x4, offset = 0x4, fixed_abs, tag = 'smem constant byte address 0x4 - core index']
  #allocation1 [shape = 'u32[72,128]{1,0:T(1,128)}', space=vmem, size = 0x9000, scoped, tag = 'internal scratch']
  %s0 = inlined_call_operand.vmem [shape: f32[128,4], index: 0, kind: input, shape index: {}]
  %s1 = inlined_call_operand.vmem [shape: f32[128,4], index: 1, kind: input, shape index: {}]
  %s2 = inlined_call_operand.vmem [shape: f32[4,4], index: 2, kind: input, shape index: {}]
  %s3 = inlined_call_operand.vmem [shape: f32[4,4], index: 3, kind: input, shape index: {}]
  %s4 = inlined_call_operand.vmem [shape: f32[8,8], index: 4, kind: output, shape index: {0}]
  %s5 = inlined_call_operand.vmem [shape: f32[8,8], index: 5, kind: output, shape index: {1}]
  %6 = xla_tuple %s4, %s5
  %s7 = sld [smem:[#allocation0]]
  $region34: #{factorized_reduce.2} parent=0
    _
  %s9 = ssub.s32 1, %s7
  %s10 = scalar_select 0, %s9, %s7
  // Predicated region
  $region2: #{factorized_reduce.2} parent=0 // pred_check
    _
  $region3: #{factorized_reduce.2} parent=0 // pred_check_branch
    %12 = sbr.rel (0) target = $region5
  $region4: #{factorized_reduce.2} parent=0 // pred_region
    _
  $region5: #{factorized_reduce.2} parent=0 // pred_fallthru
    _
  // Predicated region
  $region6: #{factorized_reduce.2} parent=0 // pred_check
    _
  $region7: #{factorized_reduce.2} parent=0 // pred_check_branch
    %14 = sbr.rel (0) target = $region9
  $region8: #{factorized_reduce.2} parent=0 // pred_region
    _
  $region9: #{factorized_reduce.2} parent=0 // pred_fallthru
    _
  // Predicated region
  $region10: #{factorized_reduce.2} parent=0 // pred_check
    _
  $region11: #{factorized_reduce.2} parent=0 // pred_check_branch
    %16 = sbr.rel (0) target = $region13
  $region12: #{factorized_reduce.2} parent=0 // pred_region
    _
  $region13: #{factorized_reduce.2} parent=0 // pred_fallthru
    _
  // Predicated region
  $region14: #{factorized_reduce.2} parent=0 // pred_check
    _
  $region15: #{factorized_reduce.2} parent=0 // pred_check_branch
    %18 = sbr.rel (0) target = $region17
  $region16: #{factorized_reduce.2} parent=0 // pred_region
    _
  $region17: #{factorized_reduce.2} parent=0 // pred_fallthru
    _
  %v19 = vld [vmem:[%s0] sm:$0xff]
  %v20 = vld [vmem:[%s0 + $0x8] sm:$0xff]
  %v21 = vld [vmem:[%s0 + $0x10] sm:$0xff]
  %v22 = vld [vmem:[%s0 + $0x18] sm:$0xff]
  %v23 = vld [vmem:[%s0 + $0x20] sm:$0xff]
  %v24 = vld [vmem:[%s0 + $0x28] sm:$0xff]
  %v25 = vld [vmem:[%s0 + $0x30] sm:$0xff]
  %v26 = vld [vmem:[%s0 + $0x38] sm:$0xff]
  %v27 = vld [vmem:[%s0 + $0x40] sm:$0xff]
  %v28 = vld [vmem:[%s0 + $0x48] sm:$0xff]
  %v29 = vld [vmem:[%s0 + $0x50] sm:$0xff]
  %v30 = vld [vmem:[%s0 + $0x58] sm:$0xff]
  %v31 = vld [vmem:[%s0 + $0x60] sm:$0xff]
  %v32 = vld [vmem:[%s0 + $0x68] sm:$0xff]
  %v33 = vld [vmem:[%s0 + $0x70] sm:$0xff]
  %v34 = vld [vmem:[%s0 + $0x78] sm:$0xff]
  %v35 = vmax.f32 %v19, 0.0
  %v36 = vmax.f32 %v20, 0.0
  %v37 = vmax.f32 %v21, 0.0
  %v38 = vmax.f32 %v22, 0.0
  %v39 = vmax.f32 %v23, 0.0
  %v40 = vmax.f32 %v24, 0.0
  %v41 = vmax.f32 %v25, 0.0
  %v42 = vmax.f32 %v26, 0.0
  %v43 = vmax.f32 %v27, 0.0
  %v44 = vmax.f32 %v28, 0.0
  %v45 = vmax.f32 %v29, 0.0
  %v46 = vmax.f32 %v30, 0.0
  %v47 = vmax.f32 %v31, 0.0
  %v48 = vmax.f32 %v32, 0.0
  %v49 = vmax.f32 %v33, 0.0
  %v50 = vmax.f32 %v34, 0.0
  %v51 = vld [vmem:[%s1] sm:$0xff]
  %v52 = vld [vmem:[%s1 + $0x8] sm:$0xff]
  %v53 = vld [vmem:[%s1 + $0x10] sm:$0xff]
  %v54 = vld [vmem:[%s1 + $0x18] sm:$0xff]
  %v55 = vld [vmem:[%s1 + $0x20] sm:$0xff]
  %v56 = vld [vmem:[%s1 + $0x28] sm:$0xff]
  %v57 = vld [vmem:[%s1 + $0x30] sm:$0xff]
  %v58 = vld [vmem:[%s1 + $0x38] sm:$0xff]
  %v59 = vld [vmem:[%s1 + $0x40] sm:$0xff]
  %v60 = vld [vmem:[%s1 + $0x48] sm:$0xff]
  %v61 = vld [vmem:[%s1 + $0x50] sm:$0xff]
  %v62 = vld [vmem:[%s1 + $0x58] sm:$0xff]
  %v63 = vld [vmem:[%s1 + $0x60] sm:$0xff]
  %v64 = vld [vmem:[%s1 + $0x68] sm:$0xff]
  %v65 = vld [vmem:[%s1 + $0x70] sm:$0xff]
  %v66 = vld [vmem:[%s1 + $0x78] sm:$0xff]
  %v67 = vmax.f32 %v51, 0.0
  %v68 = vmax.f32 %v52, 0.0
  %v69 = vmax.f32 %v53, 0.0
  %v70 = vmax.f32 %v54, 0.0
  %v71 = vmax.f32 %v55, 0.0
  %v72 = vmax.f32 %v56, 0.0
  %v73 = vmax.f32 %v57, 0.0
  %v74 = vmax.f32 %v58, 0.0
  %v75 = vmax.f32 %v59, 0.0
  %v76 = vmax.f32 %v60, 0.0
  %v77 = vmax.f32 %v61, 0.0
  %v78 = vmax.f32 %v62, 0.0
  %v79 = vmax.f32 %v63, 0.0
  %v80 = vmax.f32 %v64, 0.0
  %v81 = vmax.f32 %v65, 0.0
  %v82 = vmax.f32 %v66, 0.0
  %v83 = vld [vmem:[%s2] sm:$0xf]
  %vm84 = vcmask 31744
  %v86 = vsel %vm84, %v35, 0
  %v89 = vsel %vm84, %v36, 0
  %v92 = vsel %vm84, %v37, 0
  %v95 = vsel %vm84, %v38, 0
  %v98 = vsel %vm84, %v39, 0
  %v101 = vsel %vm84, %v40, 0
  %v104 = vsel %vm84, %v41, 0
  %v107 = vsel %vm84, %v42, 0
  %v110 = vsel %vm84, %v43, 0
  %v113 = vsel %vm84, %v44, 0
  %v116 = vsel %vm84, %v45, 0
  %v119 = vsel %vm84, %v46, 0
  %v122 = vsel %vm84, %v47, 0
  %v125 = vsel %vm84, %v48, 0
  %v128 = vsel %vm84, %v49, 0
  %v131 = vsel %vm84, %v50, 0
  %vm133 = vcmask 1043456
  %v135 = vsel %vm133, %v83, 0
  %137 = vmatpush.msra.mxu0 0.0
  %138 = vmatpush.msra.mxu0 0.0
  %139 = vmatpush.msra.mxu0 0.0
  %140 = vmatpush.msra.mxu0 0.0
  %141 = vmatpush.msra.mxu0 0.0
  %142 = vmatpush.msra.mxu0 0.0
  %143 = vmatpush.msra.mxu0 0.0
  %144 = vmatpush.msra.mxu0 0.0
  %145 = vmatpush.msra.mxu0 0.0
  %146 = vmatpush.msra.mxu0 0.0
  %147 = vmatpush.msra.mxu0 0.0
  %148 = vmatpush.msra.mxu0 0.0
  %149 = vmatpush.msra.mxu0 0.0
  %150 = vmatpush.msra.mxu0 0.0
  %151 = vmatpush.msra.mxu0 0.0
  %152 = vmatpush.msra.mxu0 %v135
  %153 = vmatmul.f32.gmra.mxu0 %v86
  %v154 = vpop.f32.mrf.mxu0
  %v155 = vadd.f32 0.0, %v154
  %156 = vmatmul.f32.gmra.mxu0 %v89
  %v157 = vpop.f32.mrf.mxu0
  %v158 = vadd.f32 0.0, %v157
  %159 = vmatmul.f32.gmra.mxu0 %v92
  %v160 = vpop.f32.mrf.mxu0
  %v161 = vadd.f32 0.0, %v160
  %162 = vmatmul.f32.gmra.mxu0 %v95
  %v163 = vpop.f32.mrf.mxu0
  %v164 = vadd.f32 0.0, %v163
  %165 = vmatmul.f32.gmra.mxu0 %v98
  %v166 = vpop.f32.mrf.mxu0
  %v167 = vadd.f32 0.0, %v166
  %168 = vmatmul.f32.gmra.mxu0 %v101
  %v169 = vpop.f32.mrf.mxu0
  %v170 = vadd.f32 0.0, %v169
  %171 = vmatmul.f32.gmra.mxu0 %v104
  %v172 = vpop.f32.mrf.mxu0
  %v173 = vadd.f32 0.0, %v172
  %174 = vmatmul.f32.gmra.mxu0 %v107
  %v175 = vpop.f32.mrf.mxu0
  %v176 = vadd.f32 0.0, %v175
  %177 = vmatmul.f32.gmra.mxu0 %v110
  %v178 = vpop.f32.mrf.mxu0
  %v179 = vadd.f32 0.0, %v178
  %180 = vmatmul.f32.gmra.mxu0 %v113
  %v181 = vpop.f32.mrf.mxu0
  %v182 = vadd.f32 0.0, %v181
  %183 = vmatmul.f32.gmra.mxu0 %v116
  %v184 = vpop.f32.mrf.mxu0
  %v185 = vadd.f32 0.0, %v184
  %186 = vmatmul.f32.gmra.mxu0 %v119
  %v187 = vpop.f32.mrf.mxu0
  %v188 = vadd.f32 0.0, %v187
  %189 = vmatmul.f32.gmra.mxu0 %v122
  %v190 = vpop.f32.mrf.mxu0
  %v191 = vadd.f32 0.0, %v190
  %192 = vmatmul.f32.gmra.mxu0 %v125
  %v193 = vpop.f32.mrf.mxu0
  %v194 = vadd.f32 0.0, %v193
  %195 = vmatmul.f32.gmra.mxu0 %v128
  %v196 = vpop.f32.mrf.mxu0
  %v197 = vadd.f32 0.0, %v196
  %198 = vmatmul.f32.gmra.mxu0 %v131
  %v199 = vpop.f32.mrf.mxu0
  %v200 = vadd.f32 0.0, %v199
  %201 = vdwg.mxu0
  %v202 = vld [vmem:[%s3] sm:$0xf]
  %v204 = vsel %vm84, %v67, 0
  %v207 = vsel %vm84, %v68, 0
  %v210 = vsel %vm84, %v69, 0
  %v213 = vsel %vm84, %v70, 0
  %v216 = vsel %vm84, %v71, 0
  %v219 = vsel %vm84, %v72, 0
  %v222 = vsel %vm84, %v73, 0
  %v225 = vsel %vm84, %v74, 0
  %v228 = vsel %vm84, %v75, 0
  %v231 = vsel %vm84, %v76, 0
  %v234 = vsel %vm84, %v77, 0
  %v237 = vsel %vm84, %v78, 0
  %v240 = vsel %vm84, %v79, 0
  %v243 = vsel %vm84, %v80, 0
  %v246 = vsel %vm84, %v81, 0
  %v249 = vsel %vm84, %v82, 0
  %v252 = vsel %vm133, %v202, 0
  %254 = vmatpush.msra.mxu0 0.0
  %255 = vmatpush.msra.mxu0 0.0
  %256 = vmatpush.msra.mxu0 0.0
  %257 = vmatpush.msra.mxu0 0.0
  %258 = vmatpush.msra.mxu0 0.0
  %259 = vmatpush.msra.mxu0 0.0
  %260 = vmatpush.msra.mxu0 0.0
  %261 = vmatpush.msra.mxu0 0.0
  %262 = vmatpush.msra.mxu0 0.0
  %263 = vmatpush.msra.mxu0 0.0
  %264 = vmatpush.msra.mxu0 0.0
  %265 = vmatpush.msra.mxu0 0.0
  %266 = vmatpush.msra.mxu0 0.0
  %267 = vmatpush.msra.mxu0 0.0
  %268 = vmatpush.msra.mxu0 0.0
  %269 = vmatpush.msra.mxu0 %v252
  %270 = vmatmul.f32.gmra.mxu0 %v204
  %v271 = vpop.f32.mrf.mxu0
  %v272 = vadd.f32 0.0, %v271
  %273 = vmatmul.f32.gmra.mxu0 %v207
  %v274 = vpop.f32.mrf.mxu0
  %v275 = vadd.f32 0.0, %v274
  %276 = vmatmul.f32.gmra.mxu0 %v210
  %v277 = vpop.f32.mrf.mxu0
  %v278 = vadd.f32 0.0, %v277
  %279 = vmatmul.f32.gmra.mxu0 %v213
  %v280 = vpop.f32.mrf.mxu0
  %v281 = vadd.f32 0.0, %v280
  %282 = vmatmul.f32.gmra.mxu0 %v216
  %v283 = vpop.f32.mrf.mxu0
  %v284 = vadd.f32 0.0, %v283
  %285 = vmatmul.f32.gmra.mxu0 %v219
  %v286 = vpop.f32.mrf.mxu0
  %v287 = vadd.f32 0.0, %v286
  %288 = vmatmul.f32.gmra.mxu0 %v222
  %v289 = vpop.f32.mrf.mxu0
  %v290 = vadd.f32 0.0, %v289
  %291 = vmatmul.f32.gmra.mxu0 %v225
  %v292 = vpop.f32.mrf.mxu0
  %v293 = vadd.f32 0.0, %v292
  %294 = vmatmul.f32.gmra.mxu0 %v228
  %v295 = vpop.f32.mrf.mxu0
  %v296 = vadd.f32 0.0, %v295
  %297 = vmatmul.f32.gmra.mxu0 %v231
  %v298 = vpop.f32.mrf.mxu0
  %v299 = vadd.f32 0.0, %v298
  %300 = vmatmul.f32.gmra.mxu0 %v234
  %v301 = vpop.f32.mrf.mxu0
  %v302 = vadd.f32 0.0, %v301
  %303 = vmatmul.f32.gmra.mxu0 %v237
  %v304 = vpop.f32.mrf.mxu0
  %v305 = vadd.f32 0.0, %v304
  %306 = vmatmul.f32.gmra.mxu0 %v240
  %v307 = vpop.f32.mrf.mxu0
  %v308 = vadd.f32 0.0, %v307
  %309 = vmatmul.f32.gmra.mxu0 %v243
  %v310 = vpop.f32.mrf.mxu0
  %v311 = vadd.f32 0.0, %v310
  %312 = vmatmul.f32.gmra.mxu0 %v246
  %v313 = vpop.f32.mrf.mxu0
  %v314 = vadd.f32 0.0, %v313
  %315 = vmatmul.f32.gmra.mxu0 %v249
  %v316 = vpop.f32.mrf.mxu0
  %v317 = vadd.f32 0.0, %v316
  %318 = vdwg.mxu0
  %335 = vrot.lane.b32.xlu0 %v272, 4
  %v336 = vpop.permute.xlu0 %335
  %337 = vrot.lane.b32.xlu0 %v275, 4
  %v338 = vpop.permute.xlu0 %337
  %339 = vrot.lane.b32.xlu0 %v278, 4
  %v340 = vpop.permute.xlu0 %339
  %341 = vrot.lane.b32.xlu0 %v281, 4
  %v342 = vpop.permute.xlu0 %341
  %343 = vrot.lane.b32.xlu0 %v284, 4
  %v344 = vpop.permute.xlu0 %343
  %345 = vrot.lane.b32.xlu0 %v287, 4
  %v346 = vpop.permute.xlu0 %345
  %347 = vrot.lane.b32.xlu0 %v290, 4
  %v348 = vpop.permute.xlu0 %347
  %349 = vrot.lane.b32.xlu0 %v293, 4
  %v350 = vpop.permute.xlu0 %349
  %351 = vrot.lane.b32.xlu0 %v296, 4
  %v352 = vpop.permute.xlu0 %351
  %353 = vrot.lane.b32.xlu0 %v299, 4
  %v354 = vpop.permute.xlu0 %353
  %355 = vrot.lane.b32.xlu0 %v302, 4
  %v356 = vpop.permute.xlu0 %355
  %357 = vrot.lane.b32.xlu0 %v305, 4
  %v358 = vpop.permute.xlu0 %357
  %359 = vrot.lane.b32.xlu0 %v308, 4
  %v360 = vpop.permute.xlu0 %359
  %361 = vrot.lane.b32.xlu0 %v311, 4
  %v362 = vpop.permute.xlu0 %361
  %363 = vrot.lane.b32.xlu0 %v314, 4
  %v364 = vpop.permute.xlu0 %363
  %365 = vrot.lane.b32.xlu0 %v317, 4
  %v366 = vpop.permute.xlu0 %365
  %v383 = vsel %vm84, %v155, %v336
  %v384 = vsel %vm84, %v158, %v338
  %v385 = vsel %vm84, %v161, %v340
  %v386 = vsel %vm84, %v164, %v342
  %v387 = vsel %vm84, %v167, %v344
  %v388 = vsel %vm84, %v170, %v346
  %v389 = vsel %vm84, %v173, %v348
  %v390 = vsel %vm84, %v176, %v350
  %v391 = vsel %vm84, %v179, %v352
  %v392 = vsel %vm84, %v182, %v354
  %v393 = vsel %vm84, %v185, %v356
  %v394 = vsel %vm84, %v188, %v358
  %v395 = vsel %vm84, %v191, %v360
  %v396 = vsel %vm84, %v194, %v362
  %v397 = vsel %vm84, %v197, %v364
  %v398 = vsel %vm84, %v200, %v366
  %vm399 = vcmask 64512
  %v400 = vsel %vm399, %v383, 0.0
  %v401 = vsel %vm399, %v384, 0.0
  %v402 = vadd.f32 %v400, %v401
  %v403 = vsel %vm399, %v385, 0.0
  %v404 = vadd.f32 %v402, %v403
  %v405 = vsel %vm399, %v386, 0.0
  %v406 = vadd.f32 %v404, %v405
  %v407 = vsel %vm399, %v387, 0.0
  %v408 = vadd.f32 %v406, %v407
  %v409 = vsel %vm399, %v388, 0.0
  %v410 = vadd.f32 %v408, %v409
  %v411 = vsel %vm399, %v389, 0.0
  %v412 = vadd.f32 %v410, %v411
  %v413 = vsel %vm399, %v390, 0.0
  %v414 = vadd.f32 %v412, %v413
  %v415 = vsel %vm399, %v391, 0.0
  %v416 = vadd.f32 %v414, %v415
  %v417 = vsel %vm399, %v392, 0.0
  %v418 = vadd.f32 %v416, %v417
  %v419 = vsel %vm399, %v393, 0.0
  %v420 = vadd.f32 %v418, %v419
  %v421 = vsel %vm399, %v394, 0.0
  %v422 = vadd.f32 %v420, %v421
  %v423 = vsel %vm399, %v395, 0.0
  %v424 = vadd.f32 %v422, %v423
  %v425 = vsel %vm399, %v396, 0.0
  %v426 = vadd.f32 %v424, %v425
  %v427 = vsel %vm399, %v397, 0.0
  %v428 = vadd.f32 %v426, %v427
  %v429 = vsel %vm399, %v398, 0.0
  %v430 = vadd.f32 %v428, %v429
  %431 = vst.msk [vmem:[%s4] sm:$0xff] %vm399, %v430
  %v432 = vmul.f32 %v383, %v383
  %v433 = vmul.f32 %v384, %v384
  %v434 = vmul.f32 %v385, %v385
  %v435 = vmul.f32 %v386, %v386
  %v436 = vmul.f32 %v387, %v387
  %v437 = vmul.f32 %v388, %v388
  %v438 = vmul.f32 %v389, %v389
  %v439 = vmul.f32 %v390, %v390
  %v440 = vmul.f32 %v391, %v391
  %v441 = vmul.f32 %v392, %v392
  %v442 = vmul.f32 %v393, %v393
  %v443 = vmul.f32 %v394, %v394
  %v444 = vmul.f32 %v395, %v395
  %v445 = vmul.f32 %v396, %v396
  %v446 = vmul.f32 %v397, %v397
  %v447 = vmul.f32 %v398, %v398
  %v448 = vsel %vm399, %v432, 0.0
  %v449 = vsel %vm399, %v433, 0.0
  %v450 = vadd.f32 %v448, %v449
  %v451 = vsel %vm399, %v434, 0.0
  %v452 = vadd.f32 %v450, %v451
  %v453 = vsel %vm399, %v435, 0.0
  %v454 = vadd.f32 %v452, %v453
  %v455 = vsel %vm399, %v436, 0.0
  %v456 = vadd.f32 %v454, %v455
  %v457 = vsel %vm399, %v437, 0.0
  %v458 = vadd.f32 %v456, %v457
  %v459 = vsel %vm399, %v438, 0.0
  %v460 = vadd.f32 %v458, %v459
  %v461 = vsel %vm399, %v439, 0.0
  %v462 = vadd.f32 %v460, %v461
  %v463 = vsel %vm399, %v440, 0.0
  %v464 = vadd.f32 %v462, %v463
  %v465 = vsel %vm399, %v441, 0.0
  %v466 = vadd.f32 %v464, %v465
  %v467 = vsel %vm399, %v442, 0.0
  %v468 = vadd.f32 %v466, %v467
  %v469 = vsel %vm399, %v443, 0.0
  %v470 = vadd.f32 %v468, %v469
  %v471 = vsel %vm399, %v444, 0.0
  %v472 = vadd.f32 %v470, %v471
  %v473 = vsel %vm399, %v445, 0.0
  %v474 = vadd.f32 %v472, %v473
  %v475 = vsel %vm399, %v446, 0.0
  %v476 = vadd.f32 %v474, %v475
  %v477 = vsel %vm399, %v447, 0.0
  %v478 = vadd.f32 %v476, %v477
  %479 = vst.msk [vmem:[%s5] sm:$0xff] %vm399, %v478
  // Predicated region
  $region18: #{factorized_reduce.2} parent=0 // pred_check
    _
  $region19: #{factorized_reduce.2} parent=0 // pred_check_branch
    %481 = sbr.rel (0) target = $region21
  $region20: #{factorized_reduce.2} parent=0 // pred_region
    _
  $region21: #{factorized_reduce.2} parent=0 // pred_fallthru
    _
  // Predicated region
  $region22: #{factorized_reduce.2} parent=0 // pred_check
    _
  $region23: #{factorized_reduce.2} parent=0 // pred_check_branch
    %483 = sbr.rel (0) target = $region25
  $region24: #{factorized_reduce.2} parent=0 // pred_region
    _
  $region25: #{factorized_reduce.2} parent=0 // pred_fallthru
    _
  // Predicated region
  $region26: #{factorized_reduce.2} parent=0 // pred_check
    _
  $region27: #{factorized_reduce.2} parent=0 // pred_check_branch
    %485 = sbr.rel (0) target = $region29
  $region28: #{factorized_reduce.2} parent=0 // pred_region
    _
  $region29: #{factorized_reduce.2} parent=0 // pred_fallthru
    _
  // Predicated region
  $region30: #{factorized_reduce.2} parent=0 // pred_check
    _
  $region31: #{factorized_reduce.2} parent=0 // pred_check_branch
    %487 = sbr.rel (0) target = $region33
  $region32: #{factorized_reduce.2} parent=0 // pred_region
    _
  $region33: #{factorized_reduce.2} parent=0 // pred_fallthru
    _

// kernel: factorized_reduce.3
$region0: #{factorized_reduce.3}
  #allocation0 [shape = 'u32[]', space=smem, size = 0x4, offset = 0x4, fixed_abs, tag = 'smem constant byte address 0x4 - core index']
  #allocation1 [shape = 'u32[72,128]{1,0:T(1,128)}', space=vmem, size = 0x9000, scoped, tag = 'internal scratch']
  %s0 = inlined_call_operand.vmem [shape: f32[128,4], index: 0, kind: input, shape index: {}]
  %s1 = inlined_call_operand.vmem [shape: f32[128,4], index: 1, kind: input, shape index: {}]
  %s2 = inlined_call_operand.vmem [shape: f32[4,4], index: 2, kind: input, shape index: {}]
  %s3 = inlined_call_operand.vmem [shape: f32[4,4], index: 3, kind: input, shape index: {}]
  %s4 = inlined_call_operand.vmem [shape: f32[1,8], index: 4, kind: input, shape index: {}]
  %s5 = inlined_call_operand.vmem [shape: f32[1,8], index: 5, kind: input, shape index: {}]
  %s6 = inlined_call_operand.vmem [shape: f32[128,8], index: 6, kind: output, shape index: {}]
  %s7 = sld [smem:[#allocation0]]
  $region34: #{factorized_reduce.3} parent=0
    _
  %s9 = ssub.s32 1, %s7
  %s10 = scalar_select 0, %s9, %s7
  // Predicated region
  $region2: #{factorized_reduce.3} parent=0 // pred_check
    _
  $region3: #{factorized_reduce.3} parent=0 // pred_check_branch
    %12 = sbr.rel (0) target = $region5
  $region4: #{factorized_reduce.3} parent=0 // pred_region
    _
  $region5: #{factorized_reduce.3} parent=0 // pred_fallthru
    _
  // Predicated region
  $region6: #{factorized_reduce.3} parent=0 // pred_check
    _
  $region7: #{factorized_reduce.3} parent=0 // pred_check_branch
    %14 = sbr.rel (0) target = $region9
  $region8: #{factorized_reduce.3} parent=0 // pred_region
    _
  $region9: #{factorized_reduce.3} parent=0 // pred_fallthru
    _
  // Predicated region
  $region10: #{factorized_reduce.3} parent=0 // pred_check
    _
  $region11: #{factorized_reduce.3} parent=0 // pred_check_branch
    %16 = sbr.rel (0) target = $region13
  $region12: #{factorized_reduce.3} parent=0 // pred_region
    _
  $region13: #{factorized_reduce.3} parent=0 // pred_fallthru
    _
  // Predicated region
  $region14: #{factorized_reduce.3} parent=0 // pred_check
    _
  $region15: #{factorized_reduce.3} parent=0 // pred_check_branch
    %18 = sbr.rel (0) target = $region17
  $region16: #{factorized_reduce.3} parent=0 // pred_region
    _
  $region17: #{factorized_reduce.3} parent=0 // pred_fallthru
    _
  // Predicated region
  $region18: #{factorized_reduce.3} parent=0 // pred_check
    _
  $region19: #{factorized_reduce.3} parent=0 // pred_check_branch
    %20 = sbr.rel (0) target = $region21
  $region20: #{factorized_reduce.3} parent=0 // pred_region
    _
  $region21: #{factorized_reduce.3} parent=0 // pred_fallthru
    _
  // Predicated region
  $region22: #{factorized_reduce.3} parent=0 // pred_check
    _
  $region23: #{factorized_reduce.3} parent=0 // pred_check_branch
    %22 = sbr.rel (0) target = $region25
  $region24: #{factorized_reduce.3} parent=0 // pred_region
    _
  $region25: #{factorized_reduce.3} parent=0 // pred_fallthru
    _
  %v23 = vld [vmem:[%s0] sm:$0xff]
  %v24 = vld [vmem:[%s0 + $0x8] sm:$0xff]
  %v25 = vld [vmem:[%s0 + $0x10] sm:$0xff]
  %v26 = vld [vmem:[%s0 + $0x18] sm:$0xff]
  %v27 = vld [vmem:[%s0 + $0x20] sm:$0xff]
  %v28 = vld [vmem:[%s0 + $0x28] sm:$0xff]
  %v29 = vld [vmem:[%s0 + $0x30] sm:$0xff]
  %v30 = vld [vmem:[%s0 + $0x38] sm:$0xff]
  %v31 = vld [vmem:[%s0 + $0x40] sm:$0xff]
  %v32 = vld [vmem:[%s0 + $0x48] sm:$0xff]
  %v33 = vld [vmem:[%s0 + $0x50] sm:$0xff]
  %v34 = vld [vmem:[%s0 + $0x58] sm:$0xff]
  %v35 = vld [vmem:[%s0 + $0x60] sm:$0xff]
  %v36 = vld [vmem:[%s0 + $0x68] sm:$0xff]
  %v37 = vld [vmem:[%s0 + $0x70] sm:$0xff]
  %v38 = vld [vmem:[%s0 + $0x78] sm:$0xff]
  %v39 = vmax.f32 %v23, 0.0
  %v40 = vmax.f32 %v24, 0.0
  %v41 = vmax.f32 %v25, 0.0
  %v42 = vmax.f32 %v26, 0.0
  %v43 = vmax.f32 %v27, 0.0
  %v44 = vmax.f32 %v28, 0.0
  %v45 = vmax.f32 %v29, 0.0
  %v46 = vmax.f32 %v30, 0.0
  %v47 = vmax.f32 %v31, 0.0
  %v48 = vmax.f32 %v32, 0.0
  %v49 = vmax.f32 %v33, 0.0
  %v50 = vmax.f32 %v34, 0.0
  %v51 = vmax.f32 %v35, 0.0
  %v52 = vmax.f32 %v36, 0.0
  %v53 = vmax.f32 %v37, 0.0
  %v54 = vmax.f32 %v38, 0.0
  %v55 = vld [vmem:[%s1] sm:$0xff]
  %v56 = vld [vmem:[%s1 + $0x8] sm:$0xff]
  %v57 = vld [vmem:[%s1 + $0x10] sm:$0xff]
  %v58 = vld [vmem:[%s1 + $0x18] sm:$0xff]
  %v59 = vld [vmem:[%s1 + $0x20] sm:$0xff]
  %v60 = vld [vmem:[%s1 + $0x28] sm:$0xff]
  %v61 = vld [vmem:[%s1 + $0x30] sm:$0xff]
  %v62 = vld [vmem:[%s1 + $0x38] sm:$0xff]
  %v63 = vld [vmem:[%s1 + $0x40] sm:$0xff]
  %v64 = vld [vmem:[%s1 + $0x48] sm:$0xff]
  %v65 = vld [vmem:[%s1 + $0x50] sm:$0xff]
  %v66 = vld [vmem:[%s1 + $0x58] sm:$0xff]
  %v67 = vld [vmem:[%s1 + $0x60] sm:$0xff]
  %v68 = vld [vmem:[%s1 + $0x68] sm:$0xff]
  %v69 = vld [vmem:[%s1 + $0x70] sm:$0xff]
  %v70 = vld [vmem:[%s1 + $0x78] sm:$0xff]
  %v71 = vmax.f32 %v55, 0.0
  %v72 = vmax.f32 %v56, 0.0
  %v73 = vmax.f32 %v57, 0.0
  %v74 = vmax.f32 %v58, 0.0
  %v75 = vmax.f32 %v59, 0.0
  %v76 = vmax.f32 %v60, 0.0
  %v77 = vmax.f32 %v61, 0.0
  %v78 = vmax.f32 %v62, 0.0
  %v79 = vmax.f32 %v63, 0.0
  %v80 = vmax.f32 %v64, 0.0
  %v81 = vmax.f32 %v65, 0.0
  %v82 = vmax.f32 %v66, 0.0
  %v83 = vmax.f32 %v67, 0.0
  %v84 = vmax.f32 %v68, 0.0
  %v85 = vmax.f32 %v69, 0.0
  %v86 = vmax.f32 %v70, 0.0
  %v87 = vld [vmem:[%s2] sm:$0xf]
  %vm88 = vcmask 31744
  %v90 = vsel %vm88, %v39, 0
  %v93 = vsel %vm88, %v40, 0
  %v96 = vsel %vm88, %v41, 0
  %v99 = vsel %vm88, %v42, 0
  %v102 = vsel %vm88, %v43, 0
  %v105 = vsel %vm88, %v44, 0
  %v108 = vsel %vm88, %v45, 0
  %v111 = vsel %vm88, %v46, 0
  %v114 = vsel %vm88, %v47, 0
  %v117 = vsel %vm88, %v48, 0
  %v120 = vsel %vm88, %v49, 0
  %v123 = vsel %vm88, %v50, 0
  %v126 = vsel %vm88, %v51, 0
  %v129 = vsel %vm88, %v52, 0
  %v132 = vsel %vm88, %v53, 0
  %v135 = vsel %vm88, %v54, 0
  %vm137 = vcmask 1043456
  %v139 = vsel %vm137, %v87, 0
  %141 = vmatpush.msra.mxu0 0.0
  %142 = vmatpush.msra.mxu0 0.0
  %143 = vmatpush.msra.mxu0 0.0
  %144 = vmatpush.msra.mxu0 0.0
  %145 = vmatpush.msra.mxu0 0.0
  %146 = vmatpush.msra.mxu0 0.0
  %147 = vmatpush.msra.mxu0 0.0
  %148 = vmatpush.msra.mxu0 0.0
  %149 = vmatpush.msra.mxu0 0.0
  %150 = vmatpush.msra.mxu0 0.0
  %151 = vmatpush.msra.mxu0 0.0
  %152 = vmatpush.msra.mxu0 0.0
  %153 = vmatpush.msra.mxu0 0.0
  %154 = vmatpush.msra.mxu0 0.0
  %155 = vmatpush.msra.mxu0 0.0
  %156 = vmatpush.msra.mxu0 %v139
  %157 = vmatmul.f32.gmra.mxu0 %v90
  %v158 = vpop.f32.mrf.mxu0
  %v159 = vadd.f32 0.0, %v158
  %160 = vmatmul.f32.gmra.mxu0 %v93
  %v161 = vpop.f32.mrf.mxu0
  %v162 = vadd.f32 0.0, %v161
  %163 = vmatmul.f32.gmra.mxu0 %v96
  %v164 = vpop.f32.mrf.mxu0
  %v165 = vadd.f32 0.0, %v164
  %166 = vmatmul.f32.gmra.mxu0 %v99
  %v167 = vpop.f32.mrf.mxu0
  %v168 = vadd.f32 0.0, %v167
  %169 = vmatmul.f32.gmra.mxu0 %v102
  %v170 = vpop.f32.mrf.mxu0
  %v171 = vadd.f32 0.0, %v170
  %172 = vmatmul.f32.gmra.mxu0 %v105
  %v173 = vpop.f32.mrf.mxu0
  %v174 = vadd.f32 0.0, %v173
  %175 = vmatmul.f32.gmra.mxu0 %v108
  %v176 = vpop.f32.mrf.mxu0
  %v177 = vadd.f32 0.0, %v176
  %178 = vmatmul.f32.gmra.mxu0 %v111
  %v179 = vpop.f32.mrf.mxu0
  %v180 = vadd.f32 0.0, %v179
  %181 = vmatmul.f32.gmra.mxu0 %v114
  %v182 = vpop.f32.mrf.mxu0
  %v183 = vadd.f32 0.0, %v182
  %184 = vmatmul.f32.gmra.mxu0 %v117
  %v185 = vpop.f32.mrf.mxu0
  %v186 = vadd.f32 0.0, %v185
  %187 = vmatmul.f32.gmra.mxu0 %v120
  %v188 = vpop.f32.mrf.mxu0
  %v189 = vadd.f32 0.0, %v188
  %190 = vmatmul.f32.gmra.mxu0 %v123
  %v191 = vpop.f32.mrf.mxu0
  %v192 = vadd.f32 0.0, %v191
  %193 = vmatmul.f32.gmra.mxu0 %v126
  %v194 = vpop.f32.mrf.mxu0
  %v195 = vadd.f32 0.0, %v194
  %196 = vmatmul.f32.gmra.mxu0 %v129
  %v197 = vpop.f32.mrf.mxu0
  %v198 = vadd.f32 0.0, %v197
  %199 = vmatmul.f32.gmra.mxu0 %v132
  %v200 = vpop.f32.mrf.mxu0
  %v201 = vadd.f32 0.0, %v200
  %202 = vmatmul.f32.gmra.mxu0 %v135
  %v203 = vpop.f32.mrf.mxu0
  %v204 = vadd.f32 0.0, %v203
  %205 = vdwg.mxu0
  %v206 = vld [vmem:[%s3] sm:$0xf]
  %v208 = vsel %vm88, %v71, 0
  %v211 = vsel %vm88, %v72, 0
  %v214 = vsel %vm88, %v73, 0
  %v217 = vsel %vm88, %v74, 0
  %v220 = vsel %vm88, %v75, 0
  %v223 = vsel %vm88, %v76, 0
  %v226 = vsel %vm88, %v77, 0
  %v229 = vsel %vm88, %v78, 0
  %v232 = vsel %vm88, %v79, 0
  %v235 = vsel %vm88, %v80, 0
  %v238 = vsel %vm88, %v81, 0
  %v241 = vsel %vm88, %v82, 0
  %v244 = vsel %vm88, %v83, 0
  %v247 = vsel %vm88, %v84, 0
  %v250 = vsel %vm88, %v85, 0
  %v253 = vsel %vm88, %v86, 0
  %v256 = vsel %vm137, %v206, 0
  %258 = vmatpush.msra.mxu0 0.0
  %259 = vmatpush.msra.mxu0 0.0
  %260 = vmatpush.msra.mxu0 0.0
  %261 = vmatpush.msra.mxu0 0.0
  %262 = vmatpush.msra.mxu0 0.0
  %263 = vmatpush.msra.mxu0 0.0
  %264 = vmatpush.msra.mxu0 0.0
  %265 = vmatpush.msra.mxu0 0.0
  %266 = vmatpush.msra.mxu0 0.0
  %267 = vmatpush.msra.mxu0 0.0
  %268 = vmatpush.msra.mxu0 0.0
  %269 = vmatpush.msra.mxu0 0.0
  %270 = vmatpush.msra.mxu0 0.0
  %271 = vmatpush.msra.mxu0 0.0
  %272 = vmatpush.msra.mxu0 0.0
  %273 = vmatpush.msra.mxu0 %v256
  %274 = vmatmul.f32.gmra.mxu0 %v208
  %v275 = vpop.f32.mrf.mxu0
  %v276 = vadd.f32 0.0, %v275
  %277 = vmatmul.f32.gmra.mxu0 %v211
  %v278 = vpop.f32.mrf.mxu0
  %v279 = vadd.f32 0.0, %v278
  %280 = vmatmul.f32.gmra.mxu0 %v214
  %v281 = vpop.f32.mrf.mxu0
  %v282 = vadd.f32 0.0, %v281
  %283 = vmatmul.f32.gmra.mxu0 %v217
  %v284 = vpop.f32.mrf.mxu0
  %v285 = vadd.f32 0.0, %v284
  %286 = vmatmul.f32.gmra.mxu0 %v220
  %v287 = vpop.f32.mrf.mxu0
  %v288 = vadd.f32 0.0, %v287
  %289 = vmatmul.f32.gmra.mxu0 %v223
  %v290 = vpop.f32.mrf.mxu0
  %v291 = vadd.f32 0.0, %v290
  %292 = vmatmul.f32.gmra.mxu0 %v226
  %v293 = vpop.f32.mrf.mxu0
  %v294 = vadd.f32 0.0, %v293
  %295 = vmatmul.f32.gmra.mxu0 %v229
  %v296 = vpop.f32.mrf.mxu0
  %v297 = vadd.f32 0.0, %v296
  %298 = vmatmul.f32.gmra.mxu0 %v232
  %v299 = vpop.f32.mrf.mxu0
  %v300 = vadd.f32 0.0, %v299
  %301 = vmatmul.f32.gmra.mxu0 %v235
  %v302 = vpop.f32.mrf.mxu0
  %v303 = vadd.f32 0.0, %v302
  %304 = vmatmul.f32.gmra.mxu0 %v238
  %v305 = vpop.f32.mrf.mxu0
  %v306 = vadd.f32 0.0, %v305
  %307 = vmatmul.f32.gmra.mxu0 %v241
  %v308 = vpop.f32.mrf.mxu0
  %v309 = vadd.f32 0.0, %v308
  %310 = vmatmul.f32.gmra.mxu0 %v244
  %v311 = vpop.f32.mrf.mxu0
  %v312 = vadd.f32 0.0, %v311
  %313 = vmatmul.f32.gmra.mxu0 %v247
  %v314 = vpop.f32.mrf.mxu0
  %v315 = vadd.f32 0.0, %v314
  %316 = vmatmul.f32.gmra.mxu0 %v250
  %v317 = vpop.f32.mrf.mxu0
  %v318 = vadd.f32 0.0, %v317
  %319 = vmatmul.f32.gmra.mxu0 %v253
  %v320 = vpop.f32.mrf.mxu0
  %v321 = vadd.f32 0.0, %v320
  %322 = vdwg.mxu0
  %339 = vrot.lane.b32.xlu0 %v276, 4
  %v340 = vpop.permute.xlu0 %339
  %341 = vrot.lane.b32.xlu0 %v279, 4
  %v342 = vpop.permute.xlu0 %341
  %343 = vrot.lane.b32.xlu0 %v282, 4
  %v344 = vpop.permute.xlu0 %343
  %345 = vrot.lane.b32.xlu0 %v285, 4
  %v346 = vpop.permute.xlu0 %345
  %347 = vrot.lane.b32.xlu0 %v288, 4
  %v348 = vpop.permute.xlu0 %347
  %349 = vrot.lane.b32.xlu0 %v291, 4
  %v350 = vpop.permute.xlu0 %349
  %351 = vrot.lane.b32.xlu0 %v294, 4
  %v352 = vpop.permute.xlu0 %351
  %353 = vrot.lane.b32.xlu0 %v297, 4
  %v354 = vpop.permute.xlu0 %353
  %355 = vrot.lane.b32.xlu0 %v300, 4
  %v356 = vpop.permute.xlu0 %355
  %357 = vrot.lane.b32.xlu0 %v303, 4
  %v358 = vpop.permute.xlu0 %357
  %359 = vrot.lane.b32.xlu0 %v306, 4
  %v360 = vpop.permute.xlu0 %359
  %361 = vrot.lane.b32.xlu0 %v309, 4
  %v362 = vpop.permute.xlu0 %361
  %363 = vrot.lane.b32.xlu0 %v312, 4
  %v364 = vpop.permute.xlu0 %363
  %365 = vrot.lane.b32.xlu0 %v315, 4
  %v366 = vpop.permute.xlu0 %365
  %367 = vrot.lane.b32.xlu0 %v318, 4
  %v368 = vpop.permute.xlu0 %367
  %369 = vrot.lane.b32.xlu0 %v321, 4
  %v370 = vpop.permute.xlu0 %369
  %v387 = vsel %vm88, %v159, %v340
  %v388 = vsel %vm88, %v162, %v342
  %v389 = vsel %vm88, %v165, %v344
  %v390 = vsel %vm88, %v168, %v346
  %v391 = vsel %vm88, %v171, %v348
  %v392 = vsel %vm88, %v174, %v350
  %v393 = vsel %vm88, %v177, %v352
  %v394 = vsel %vm88, %v180, %v354
  %v395 = vsel %vm88, %v183, %v356
  %v396 = vsel %vm88, %v186, %v358
  %v397 = vsel %vm88, %v189, %v360
  %v398 = vsel %vm88, %v192, %v362
  %v399 = vsel %vm88, %v195, %v364
  %v400 = vsel %vm88, %v198, %v366
  %v401 = vsel %vm88, %v201, %v368
  %v402 = vsel %vm88, %v204, %v370
  %v403 = vld [vmem:[%s4] sm:$0x1]
  %v405 = vperm.slane %v403, 0
  %v407 = vmul.f32 %v387, %v405
  %v408 = vmul.f32 %v388, %v405
  %v409 = vmul.f32 %v389, %v405
  %v410 = vmul.f32 %v390, %v405
  %v411 = vmul.f32 %v391, %v405
  %v412 = vmul.f32 %v392, %v405
  %v413 = vmul.f32 %v393, %v405
  %v414 = vmul.f32 %v394, %v405
  %v415 = vmul.f32 %v395, %v405
  %v416 = vmul.f32 %v396, %v405
  %v417 = vmul.f32 %v397, %v405
  %v418 = vmul.f32 %v398, %v405
  %v419 = vmul.f32 %v399, %v405
  %v420 = vmul.f32 %v400, %v405
  %v421 = vmul.f32 %v401, %v405
  %v422 = vmul.f32 %v402, %v405
  %v423 = vld [vmem:[%s5] sm:$0x1]
  %v425 = vperm.slane %v423, 0
  %v427 = vadd.f32 %v407, %v425
  %v428 = vadd.f32 %v408, %v425
  %v429 = vadd.f32 %v409, %v425
  %v430 = vadd.f32 %v410, %v425
  %v431 = vadd.f32 %v411, %v425
  %v432 = vadd.f32 %v412, %v425
  %v433 = vadd.f32 %v413, %v425
  %v434 = vadd.f32 %v414, %v425
  %v435 = vadd.f32 %v415, %v425
  %v436 = vadd.f32 %v416, %v425
  %v437 = vadd.f32 %v417, %v425
  %v438 = vadd.f32 %v418, %v425
  %v439 = vadd.f32 %v419, %v425
  %v440 = vadd.f32 %v420, %v425
  %v441 = vadd.f32 %v421, %v425
  %v442 = vadd.f32 %v422, %v425
  %vm443 = vcmask 64512
  %444 = vst.msk [vmem:[%s6] sm:$0xff] %vm443, %v427
  %445 = vst.msk [vmem:[%s6 + $0x8] sm:$0xff] %vm443, %v428
  %446 = vst.msk [vmem:[%s6 + $0x10] sm:$0xff] %vm443, %v429
  %447 = vst.msk [vmem:[%s6 + $0x18] sm:$0xff] %vm443, %v430
  %448 = vst.msk [vmem:[%s6 + $0x20] sm:$0xff] %vm443, %v431
  %449 = vst.msk [vmem:[%s6 + $0x28] sm:$0xff] %vm443, %v432
  %450 = vst.msk [vmem:[%s6 + $0x30] sm:$0xff] %vm443, %v433
  %451 = vst.msk [vmem:[%s6 + $0x38] sm:$0xff] %vm443, %v434
  %452 = vst.msk [vmem:[%s6 + $0x40] sm:$0xff] %vm443, %v435
  %453 = vst.msk [vmem:[%s6 + $0x48] sm:$0xff] %vm443, %v436
  %454 = vst.msk [vmem:[%s6 + $0x50] sm:$0xff] %vm443, %v437
  %455 = vst.msk [vmem:[%s6 + $0x58] sm:$0xff] %vm443, %v438
  %456 = vst.msk [vmem:[%s6 + $0x60] sm:$0xff] %vm443, %v439
  %457 = vst.msk [vmem:[%s6 + $0x68] sm:$0xff] %vm443, %v440
  %458 = vst.msk [vmem:[%s6 + $0x70] sm:$0xff] %vm443, %v441
  %459 = vst.msk [vmem:[%s6 + $0x78] sm:$0xff] %vm443, %v442
  // Predicated region
  $region26: #{factorized_reduce.3} parent=0 // pred_check
    _
  $region27: #{factorized_reduce.3} parent=0 // pred_check_branch
    %461 = sbr.rel (0) target = $region29
  $region28: #{factorized_reduce.3} parent=0 // pred_region
    _
  $region29: #{factorized_reduce.3} parent=0 // pred_fallthru
    _
  // Predicated region
  $region30: #{factorized_reduce.3} parent=0 // pred_check
    _
  $region31: #{factorized_reduce.3} parent=0 // pred_check_branch
    %463 = sbr.rel (0) target = $region33
  $region32: #{factorized_reduce.3} parent=0 // pred_region
    _
  $region33: #{factorized_reduce.3} parent=0 // pred_fallthru
    _

</llo_original>
